<compile_context>
chip_gen: v5e
topology: v5e:2x2
jax: 0.10.0
libtpu: 0.0.40
codegen_flags: <defaults>
</compile_context>

<pallas_src>
import functools

import jax
import jax.numpy as jnp
from jax import lax
from jax.experimental import pallas as pl
from jax.experimental.pallas import tpu as pltpu


def _sublane_group_sum(x):
    """(R, C) -> (8, C): sum of 8-row sublane groups.

    All slices are (8, 128)-tile aligned (free vreg selection) and the adds
    form a balanced tree of pure VPU ops, so nothing touches the XLU.
    """
    r = x.shape[0]
    parts = [x[k * 8:(k + 1) * 8, :] for k in range(r // 8)]
    while len(parts) > 1:
        nxt = [parts[a] + parts[a + 1] for a in range(0, len(parts) - 1, 2)]
        if len(parts) % 2:
            nxt.append(parts[-1])
        parts = nxt
    return parts[0]


def _siglip_loss_kernel(scale_ref, bias_ref, img_ref, txt_t_ref, out_ref, acc_ref):
    # img_ref:   (tile, D)  row tile of image features (native dtype)
    # txt_t_ref: (D, tile)  column tile of text features, K-major (native dtype)
    # out_ref:   (8, tile)  per-row-tile lane-shaped partial sums (leading grid
    #                       dim squeezed by the BlockSpec)
    # acc_ref:   VMEM (8, tile) f32 running partial sums for the current row tile
    i = pl.program_id(0)
    j = pl.program_id(1)
    nj = pl.num_programs(1)

    @pl.when(j == 0)
    def _init():
        acc_ref[...] = jnp.zeros_like(acc_ref)

    # (tile, D) x (D, tile) on the MXU; operands stay in their native dtype
    # (bf16 runs at full MXU rate), accumulate in f32.
    logits = jnp.dot(img_ref[...], txt_t_ref[...], preferred_element_type=jnp.float32)
    logits = scale_ref[0] * logits + bias_ref[0]

    # Off-diagonal labels are -1 everywhere: each element contributes
    # -logsigmoid(-logits) = softplus(logits) to the (positive) accumulator.
    # Stable form: softplus(x) = max(x, 0) + log1p(exp(-|x|))  (EUP ops).
    sp = jnp.maximum(logits, 0.0) + jnp.log1p(jnp.exp(-jnp.abs(logits)))
    acc_ref[...] += _sublane_group_sum(sp)

    # Diagonal (label = +1) correction, only on diagonal tiles:
    # softplus(z) - z = -logsigmoid(z)  ->  subtract trace(logits_tile).
    @pl.when(i == j)
    def _diag():
        r = lax.broadcasted_iota(jnp.int32, logits.shape, 0)
        c = lax.broadcasted_iota(jnp.int32, logits.shape, 1)
        diag = jnp.where(r == c, logits, jnp.float32(0.0))
        acc_ref[...] -= _sublane_group_sum(diag)

    @pl.when(j == nj - 1)
    def _finalize():
        out_ref[...] = acc_ref[...]


def _pick_tile(n):
    # Multiples of 256 feed the v6e/v7x 256-wide MXU; 128 matches v5e; fall back
    # to the full dimension for tiny batches (full-extent blocks are always legal).
    for t in (512, 256, 128):
        if n % t == 0:
            return t
    return n


@functools.partial(jax.jit, static_argnames=("tile",))
def siglip_loss(image_features, text_features, logit_scale, logit_bias, *, tile=None):
    """Pallas implementation of SigLipLoss.forward (world_size == 1)."""
    N, D = image_features.shape
    assert text_features.shape == (N, D)
    if tile is None:
        tile = _pick_tile(N)
    assert N % tile == 0, f"tile {tile} must divide batch size {N}"
    assert tile % 8 == 0, f"tile {tile} must be a multiple of 8"
    num_i = N // tile
    num_j = N // tile

    scale = jnp.asarray(logit_scale, jnp.float32).reshape(1)
    bias = jnp.asarray(logit_bias, jnp.float32).reshape(1)
    # K-major RHS: one-time layout plumbing in the wrapper, avoids per-tile
    # transposes inside the kernel.
    txt_t = text_features.T  # (D, N)

    partials = pl.pallas_call(
        _siglip_loss_kernel,
        out_shape=jax.ShapeDtypeStruct((num_i, 8, tile), jnp.float32),
        grid=(num_i, num_j),
        in_specs=[
            pl.BlockSpec(memory_space=pltpu.SMEM),               # logit_scale (1,)
            pl.BlockSpec(memory_space=pltpu.SMEM),               # logit_bias  (1,)
            pl.BlockSpec((tile, D), lambda i, j: (i, 0)),         # image rows
            pl.BlockSpec((D, tile), lambda i, j: (0, j)),         # text cols (K-major)
        ],
        # Leading dim squeezed -> kernel writes a lane-dense (8, tile) block.
        out_specs=pl.BlockSpec((None, 8, tile), lambda i, j: (i, 0, 0)),
        scratch_shapes=[pltpu.VMEM((8, tile), jnp.float32)],
        compiler_params=pltpu.CompilerParams(
            # i axis is independent across row tiles -> shard across TCs (v7x);
            # j is the reduction axis for the per-row-tile accumulator.
            dimension_semantics=("parallel", "arbitrary"),
            vmem_limit_bytes=48 * 1024 * 1024,
        ),
    )(scale, bias, image_features, txt_t)

    # partials already hold sum(softplus) - trace, split across lanes.
    return jnp.sum(partials) / jnp.float32(N)


def siglip_loss_ref(image_features, text_features, logit_scale, logit_bias):
    """Plain-JAX reference mirroring the PyTorch module."""
    img = image_features.astype(jnp.float32)
    txt = text_features.astype(jnp.float32)
    logits = logit_scale * jnp.dot(img, txt.T, precision=lax.Precision.HIGHEST) + logit_bias
    n = img.shape[0]
    labels = 2.0 * jnp.eye(n, dtype=jnp.float32) - jnp.ones((n, n), jnp.float32)
    return -jnp.sum(jax.nn.log_sigmoid(labels * logits)) / n


if __name__ == "__main__":
    key = jax.random.PRNGKey(0)
    k_img, k_txt = jax.random.split(key)

    # Small but tile-able shapes: 2x2 grid of 128-wide tiles exercises both the
    # diagonal-correction path and the cross-j accumulation.
    N, D = 256, 128
    image_features = jax.random.normal(k_img, (N, D), jnp.float32)
    text_features = jax.random.normal(k_txt, (N, D), jnp.float32)
    # L2-normalize features as CLIP/SigLIP models do before the loss.
    image_features = image_features / jnp.linalg.norm(image_features, axis=-1, keepdims=True)
    text_features = text_features / jnp.linalg.norm(text_features, axis=-1, keepdims=True)

    # Deterministic "parameters": SigLIP default init (scale=10, bias=-10).
    logit_scale = jnp.float32(10.0)
    logit_bias = jnp.float32(-10.0)

    loss = siglip_loss(image_features, text_features, logit_scale, logit_bias, tile=128)
    loss = jax.block_until_ready(loss)

    ref = siglip_loss_ref(image_features, text_features, logit_scale, logit_bias)
    assert jnp.allclose(loss, ref, rtol=1e-3, atol=1e-3), (loss, ref)
    print("KERNEL_OK")
</pallas_src>

<mosaic_0001>
module attributes {stable_mosaic.version = 11 : i64} {
  func.func @_siglip_loss_kernel(%arg0: i32, %arg1: i32, %arg2: memref<1xf32, #tpu.memory_space<smem>>, %arg3: memref<1xf32, #tpu.memory_space<smem>>, %arg4: memref<128x128xf32, #tpu.memory_space<vmem>>, %arg5: memref<128x128xf32, #tpu.memory_space<vmem>>, %arg6: memref<1x8x128xf32, #tpu.memory_space<vmem>>, %arg7: memref<8x128xf32, #tpu.memory_space<vmem>>) attributes {dimension_semantics = [#tpu.dimension_semantics<parallel>, #tpu.dimension_semantics<arbitrary>], iteration_bounds = array<i64: 2, 2>, scalar_prefetch = 0 : i64, scratch_operands = 1 : i64, tpu.core_type = #tpu.core_type<tc>, window_params = [{transform_indices = @transform_0, window_bounds = array<i64: 1>}, {transform_indices = @transform_1, window_bounds = array<i64: 1>}, {transform_indices = @transform_2, window_bounds = array<i64: 128, 128>}, {transform_indices = @transform_3, window_bounds = array<i64: 128, 128>}, {transform_indices = @transform_4, window_bounds = array<i64: 1, 8, 128>}]} {
    %c0_i32 = arith.constant 0 : i32
    %0 = arith.cmpi eq, %arg1, %c0_i32 : i32
    %1 = arith.extui %0 : i1 to i32
    %c0_i32_0 = arith.constant 0 : i32
    %2 = arith.cmpi ne, %1, %c0_i32_0 : i32
    scf.if %2 {
      %cst_14 = arith.constant 0.000000e+00 : f32
      %60 = vector.broadcast %cst_14 : f32 to vector<8x128xf32>
      %c0_15 = arith.constant 0 : index
      %c0_16 = arith.constant 0 : index
      %61 = vector.load %arg7[%c0_15, %c0_16] : memref<8x128xf32, #tpu.memory_space<vmem>>, vector<8x128xf32>
      tpu.vector_store %arg7[%c0_15, %c0_16], %60 {strides = array<i32>} : memref<8x128xf32, #tpu.memory_space<vmem>>, vector<8x128xf32>,
    } else {
    }
    %c0 = arith.constant 0 : index
    %c0_1 = arith.constant 0 : index
    %3 = vector.load %arg4[%c0, %c0_1] : memref<128x128xf32, #tpu.memory_space<vmem>>, vector<128x128xf32>
    %c0_2 = arith.constant 0 : index
    %c0_3 = arith.constant 0 : index
    %4 = vector.load %arg5[%c0_2, %c0_3] : memref<128x128xf32, #tpu.memory_space<vmem>>, vector<128x128xf32>
    %cst = arith.constant dense<0.000000e+00> : vector<128x128xf32>
    %5 = tpu.matmul %3, %4, %cst {dimension_numbers = #tpu.dot_dimension_numbers<[1], [0], [0], [1], [0, 0, 1, 1], [], []>} : vector<128x128xf32>, vector<128x128xf32>, vector<128x128xf32> -> vector<128x128xf32>
    %c0_4 = arith.constant 0 : index
    %6 = memref.load %arg2[%c0_4] : memref<1xf32, #tpu.memory_space<smem>>
    %7 = vector.broadcast %6 : f32 to vector<128x128xf32>
    %8 = arith.mulf %7, %5 : vector<128x128xf32>
    %c0_5 = arith.constant 0 : index
    %9 = memref.load %arg3[%c0_5] : memref<1xf32, #tpu.memory_space<smem>>
    %10 = vector.broadcast %9 : f32 to vector<128x128xf32>
    %11 = arith.addf %8, %10 : vector<128x128xf32>
    %cst_6 = arith.constant 0.000000e+00 : f32
    %12 = vector.broadcast %cst_6 : f32 to vector<128x128xf32>
    %13 = arith.maximumf %11, %12 : vector<128x128xf32>
    %14 = math.absf %11 : vector<128x128xf32>
    %cst_7 = arith.constant 0.000000e+00 : f32
    %15 = vector.broadcast %cst_7 : f32 to vector<128x128xf32>
    %16 = arith.subf %15, %14 : vector<128x128xf32>
    %17 = math.exp %16 : vector<128x128xf32>
    %18 = math.log1p %17 : vector<128x128xf32>
    %19 = arith.addf %13, %18 : vector<128x128xf32>
    %c0_8 = arith.constant 0 : index
    %c0_9 = arith.constant 0 : index
    %20 = vector.load %arg7[%c0_8, %c0_9] : memref<8x128xf32, #tpu.memory_space<vmem>>, vector<8x128xf32>
    %21 = vector.extract_strided_slice %19 {offsets = [0, 0], sizes = [8, 128], strides = [1, 1]} : vector<128x128xf32> to vector<8x128xf32>
    %22 = vector.extract_strided_slice %19 {offsets = [8, 0], sizes = [8, 128], strides = [1, 1]} : vector<128x128xf32> to vector<8x128xf32>
    %23 = vector.extract_strided_slice %19 {offsets = [16, 0], sizes = [8, 128], strides = [1, 1]} : vector<128x128xf32> to vector<8x128xf32>
    %24 = vector.extract_strided_slice %19 {offsets = [24, 0], sizes = [8, 128], strides = [1, 1]} : vector<128x128xf32> to vector<8x128xf32>
    %25 = vector.extract_strided_slice %19 {offsets = [32, 0], sizes = [8, 128], strides = [1, 1]} : vector<128x128xf32> to vector<8x128xf32>
    %26 = vector.extract_strided_slice %19 {offsets = [40, 0], sizes = [8, 128], strides = [1, 1]} : vector<128x128xf32> to vector<8x128xf32>
    %27 = vector.extract_strided_slice %19 {offsets = [48, 0], sizes = [8, 128], strides = [1, 1]} : vector<128x128xf32> to vector<8x128xf32>
    %28 = vector.extract_strided_slice %19 {offsets = [56, 0], sizes = [8, 128], strides = [1, 1]} : vector<128x128xf32> to vector<8x128xf32>
    %29 = vector.extract_strided_slice %19 {offsets = [64, 0], sizes = [8, 128], strides = [1, 1]} : vector<128x128xf32> to vector<8x128xf32>
    %30 = vector.extract_strided_slice %19 {offsets = [72, 0], sizes = [8, 128], strides = [1, 1]} : vector<128x128xf32> to vector<8x128xf32>
    %31 = vector.extract_strided_slice %19 {offsets = [80, 0], sizes = [8, 128], strides = [1, 1]} : vector<128x128xf32> to vector<8x128xf32>
    %32 = vector.extract_strided_slice %19 {offsets = [88, 0], sizes = [8, 128], strides = [1, 1]} : vector<128x128xf32> to vector<8x128xf32>
    %33 = vector.extract_strided_slice %19 {offsets = [96, 0], sizes = [8, 128], strides = [1, 1]} : vector<128x128xf32> to vector<8x128xf32>
    %34 = vector.extract_strided_slice %19 {offsets = [104, 0], sizes = [8, 128], strides = [1, 1]} : vector<128x128xf32> to vector<8x128xf32>
    %35 = vector.extract_strided_slice %19 {offsets = [112, 0], sizes = [8, 128], strides = [1, 1]} : vector<128x128xf32> to vector<8x128xf32>
    %36 = vector.extract_strided_slice %19 {offsets = [120, 0], sizes = [8, 128], strides = [1, 1]} : vector<128x128xf32> to vector<8x128xf32>
    %37 = arith.addf %21, %22 : vector<8x128xf32>
    %38 = arith.addf %23, %24 : vector<8x128xf32>
    %39 = arith.addf %25, %26 : vector<8x128xf32>
    %40 = arith.addf %27, %28 : vector<8x128xf32>
    %41 = arith.addf %29, %30 : vector<8x128xf32>
    %42 = arith.addf %31, %32 : vector<8x128xf32>
    %43 = arith.addf %33, %34 : vector<8x128xf32>
    %44 = arith.addf %35, %36 : vector<8x128xf32>
    %45 = arith.addf %37, %38 : vector<8x128xf32>
    %46 = arith.addf %39, %40 : vector<8x128xf32>
    %47 = arith.addf %41, %42 : vector<8x128xf32>
    %48 = arith.addf %43, %44 : vector<8x128xf32>
    %49 = arith.addf %45, %46 : vector<8x128xf32>
    %50 = arith.addf %47, %48 : vector<8x128xf32>
    %51 = arith.addf %49, %50 : vector<8x128xf32>
    %52 = arith.addf %20, %51 : vector<8x128xf32>
    %c0_10 = arith.constant 0 : index
    %c0_11 = arith.constant 0 : index
    %53 = vector.load %arg7[%c0_10, %c0_11] : memref<8x128xf32, #tpu.memory_space<vmem>>, vector<8x128xf32>
    tpu.vector_store %arg7[%c0_10, %c0_11], %52 {strides = array<i32>} : memref<8x128xf32, #tpu.memory_space<vmem>>, vector<8x128xf32>,
    %54 = arith.cmpi eq, %arg0, %arg1 : i32
    %55 = arith.extui %54 : i1 to i32
    %c0_i32_12 = arith.constant 0 : i32
    %56 = arith.cmpi ne, %55, %c0_i32_12 : i32
    scf.if %56 {
      %60 = tpu.iota {dimensions = array<i32: 0>} : vector<128x128xi32>
      %61 = tpu.iota {dimensions = array<i32: 1>} : vector<128x128xi32>
      %62 = arith.cmpi eq, %60, %61 : vector<128x128xi32>
      %cst_14 = arith.constant 0.000000e+00 : f32
      %63 = vector.broadcast %cst_14 : f32 to vector<128x128xf32>
      %64 = arith.select %62, %11, %63 : vector<128x128xi1>, vector<128x128xf32>
      %c0_15 = arith.constant 0 : index
      %c0_16 = arith.constant 0 : index
      %65 = vector.load %arg7[%c0_15, %c0_16] : memref<8x128xf32, #tpu.memory_space<vmem>>, vector<8x128xf32>
      %66 = vector.extract_strided_slice %64 {offsets = [0, 0], sizes = [8, 128], strides = [1, 1]} : vector<128x128xf32> to vector<8x128xf32>
      %67 = vector.extract_strided_slice %64 {offsets = [8, 0], sizes = [8, 128], strides = [1, 1]} : vector<128x128xf32> to vector<8x128xf32>
      %68 = vector.extract_strided_slice %64 {offsets = [16, 0], sizes = [8, 128], strides = [1, 1]} : vector<128x128xf32> to vector<8x128xf32>
      %69 = vector.extract_strided_slice %64 {offsets = [24, 0], sizes = [8, 128], strides = [1, 1]} : vector<128x128xf32> to vector<8x128xf32>
      %70 = vector.extract_strided_slice %64 {offsets = [32, 0], sizes = [8, 128], strides = [1, 1]} : vector<128x128xf32> to vector<8x128xf32>
      %71 = vector.extract_strided_slice %64 {offsets = [40, 0], sizes = [8, 128], strides = [1, 1]} : vector<128x128xf32> to vector<8x128xf32>
      %72 = vector.extract_strided_slice %64 {offsets = [48, 0], sizes = [8, 128], strides = [1, 1]} : vector<128x128xf32> to vector<8x128xf32>
      %73 = vector.extract_strided_slice %64 {offsets = [56, 0], sizes = [8, 128], strides = [1, 1]} : vector<128x128xf32> to vector<8x128xf32>
      %74 = vector.extract_strided_slice %64 {offsets = [64, 0], sizes = [8, 128], strides = [1, 1]} : vector<128x128xf32> to vector<8x128xf32>
      %75 = vector.extract_strided_slice %64 {offsets = [72, 0], sizes = [8, 128], strides = [1, 1]} : vector<128x128xf32> to vector<8x128xf32>
      %76 = vector.extract_strided_slice %64 {offsets = [80, 0], sizes = [8, 128], strides = [1, 1]} : vector<128x128xf32> to vector<8x128xf32>
      %77 = vector.extract_strided_slice %64 {offsets = [88, 0], sizes = [8, 128], strides = [1, 1]} : vector<128x128xf32> to vector<8x128xf32>
      %78 = vector.extract_strided_slice %64 {offsets = [96, 0], sizes = [8, 128], strides = [1, 1]} : vector<128x128xf32> to vector<8x128xf32>
      %79 = vector.extract_strided_slice %64 {offsets = [104, 0], sizes = [8, 128], strides = [1, 1]} : vector<128x128xf32> to vector<8x128xf32>
      %80 = vector.extract_strided_slice %64 {offsets = [112, 0], sizes = [8, 128], strides = [1, 1]} : vector<128x128xf32> to vector<8x128xf32>
      %81 = vector.extract_strided_slice %64 {offsets = [120, 0], sizes = [8, 128], strides = [1, 1]} : vector<128x128xf32> to vector<8x128xf32>
      %82 = arith.addf %66, %67 : vector<8x128xf32>
      %83 = arith.addf %68, %69 : vector<8x128xf32>
      %84 = arith.addf %70, %71 : vector<8x128xf32>
      %85 = arith.addf %72, %73 : vector<8x128xf32>
      %86 = arith.addf %74, %75 : vector<8x128xf32>
      %87 = arith.addf %76, %77 : vector<8x128xf32>
      %88 = arith.addf %78, %79 : vector<8x128xf32>
      %89 = arith.addf %80, %81 : vector<8x128xf32>
      %90 = arith.addf %82, %83 : vector<8x128xf32>
      %91 = arith.addf %84, %85 : vector<8x128xf32>
      %92 = arith.addf %86, %87 : vector<8x128xf32>
      %93 = arith.addf %88, %89 : vector<8x128xf32>
      %94 = arith.addf %90, %91 : vector<8x128xf32>
      %95 = arith.addf %92, %93 : vector<8x128xf32>
      %96 = arith.addf %94, %95 : vector<8x128xf32>
      %97 = arith.subf %65, %96 : vector<8x128xf32>
      %c0_17 = arith.constant 0 : index
      %c0_18 = arith.constant 0 : index
      %98 = vector.load %arg7[%c0_17, %c0_18] : memref<8x128xf32, #tpu.memory_space<vmem>>, vector<8x128xf32>
      tpu.vector_store %arg7[%c0_17, %c0_18], %97 {strides = array<i32>} : memref<8x128xf32, #tpu.memory_space<vmem>>, vector<8x128xf32>,
    } else {
    }
    %c1_i32 = arith.constant 1 : i32
    %57 = arith.cmpi eq, %arg1, %c1_i32 : i32
    %58 = arith.extui %57 : i1 to i32
    %c0_i32_13 = arith.constant 0 : i32
    %59 = arith.cmpi ne, %58, %c0_i32_13 : i32
    scf.if %59 {
      %c0_14 = arith.constant 0 : index
      %c0_15 = arith.constant 0 : index
      %60 = vector.load %arg7[%c0_14, %c0_15] : memref<8x128xf32, #tpu.memory_space<vmem>>, vector<8x128xf32>
      %c0_16 = arith.constant 0 : index
      %c0_17 = arith.constant 0 : index
      %c0_18 = arith.constant 0 : index
      %61 = vector.load %arg6[%c0_16, %c0_17, %c0_18] : memref<1x8x128xf32, #tpu.memory_space<vmem>>, vector<1x8x128xf32>
      %62 = vector.shape_cast %61 : vector<1x8x128xf32> to vector<8x128xf32>
      %63 = vector.shape_cast %60 : vector<8x128xf32> to vector<1x8x128xf32>
      tpu.vector_store %arg6[%c0_16, %c0_17, %c0_18], %63 {strides = array<i32>} : memref<1x8x128xf32, #tpu.memory_space<vmem>>, vector<1x8x128xf32>,
    } else {
    }
    return
  }
  func.func @transform_0(%arg0: i32, %arg1: i32) -> i32 {
    %c0_i32 = arith.constant 0 : i32
    %c0_i32_0 = arith.constant 0 : i32
    return %c0_i32 : i32
  }
  func.func @transform_1(%arg0: i32, %arg1: i32) -> i32 {
    %c0_i32 = arith.constant 0 : i32
    %c0_i32_0 = arith.constant 0 : i32
    return %c0_i32 : i32
  }
  func.func @transform_2(%arg0: i32, %arg1: i32) -> (i32, i32) {
    %c0_i32 = arith.constant 0 : i32
    %c0_i32_0 = arith.constant 0 : i32
    return %arg0, %c0_i32 : i32, i32
  }
  func.func @transform_3(%arg0: i32, %arg1: i32) -> (i32, i32) {
    %c0_i32 = arith.constant 0 : i32
    %c0_i32_0 = arith.constant 0 : i32
    return %c0_i32, %arg1 : i32, i32
  }
  func.func @transform_4(%arg0: i32, %arg1: i32) -> (i32, i32, i32) {
    %c0_i32 = arith.constant 0 : i32
    %c0_i32_0 = arith.constant 0 : i32
    %c0_i32_1 = arith.constant 0 : i32
    return %arg0, %c0_i32, %c0_i32_0 : i32, i32, i32
  }
}

</mosaic_0001>

<llo_original>
// kernel: siglip_loss.1
$region0: #{siglip_loss.1}
  #allocation0 [shape = 'u32[]', space=smem, size = 0x4, offset = 0x4, fixed_abs, tag = 'smem constant byte address 0x4 - core index']
  #allocation1 [shape = 'u32[72,128]{1,0:T(1,128)}', space=vmem, size = 0x9000, scoped, tag = 'internal scratch']
  #allocation2 [shape = 'f32[8,128]{1,0:T(8,128)}', space=vmem, size = 0x1000, scoped, tag = 'scratch operand']
  #allocation3 [shape = 'f32[1]{0:T(128)S(6)}', space=smem, size = 0x200, scoped, tag = 'scoped memory for siglip_loss.1']
  #allocation4 [shape = 'f32[1]{0:T(128)S(6)}', space=smem, size = 0x200, scoped, tag = 'scoped memory for siglip_loss.1']
  %s0 = inlined_call_operand.<no memory space> [shape: f32[1], index: 0, kind: input, shape index: {}]
  %s1 = inlined_call_operand.<no memory space> [shape: f32[1], index: 1, kind: input, shape index: {}]
  %s2 = inlined_call_operand.vmem [shape: f32[256,128], index: 2, kind: input, shape index: {}]
  %s3 = inlined_call_operand.vmem [shape: f32[128,256], index: 3, kind: input, shape index: {}]
  %s4 = inlined_call_operand.vmem [shape: f32[2,8,128], index: 4, kind: output, shape index: {}]
  %s5 = sld [smem:[#allocation0]]
  $region99: #{siglip_loss.1} parent=0
    _
  %s7 = ssub.s32 1, %s5
  %s8 = scalar_select 0, %s7, %s5
  %9 = sst [smem:[#allocation3]] %s0
  %10 = sst [smem:[#allocation4]] %s1
  $region1: #{siglip_loss.1} parent=0
    #allocation5 [shape = 'u8[131072]{0}', space=vmem, size = 0x20000, scoped, tag = 'input window, operand 3']
    loop: start=0, step=1, limit=6
    $region2: #{siglip_loss.1} parent=1 // loop_pre_header
      _
    $region3: #{siglip_loss.1} parent=1 // loop_header
      %s12 = sphi 0, %s16
      %p13 = scmp.ge.s32.totalorder %s12, 6
      %s19 = sphi 0, %s31
      %s20 = sphi 0, %s27
      %s21 = sphi 0, %s19
      %s22 = sphi 0, %s20
      %s23 = sphi 0, %s21
      %s24 = sphi 0, %s22
      %s32 = sphi 0, %s32
      %s34 = sphi 0, %s32
      %s35 = sphi 0, %s34
      %s49 = sphi 0, %s35
      %s53 = sphi 0, %s53
      %s55 = sphi 0, %s53
      %s56 = sphi 0, %s55
      %s70 = sphi 0, %s56
      %s76 = sphi 0, %s78
      %s79 = sphi 0, %s76
      %s80 = sphi 0, %s79
      %s96 = sphi 0, %s80
      %s102 = sphi 0, %s104
      %s105 = sphi 0, %s102
      %s106 = sphi 0, %s105
      %s122 = sphi 0, %s106
      %s128 = sphi 0, %s130
      %s131 = sphi 0, %s128
      %s132 = sphi 0, %s131
      %s148 = sphi 0, %s132
    $region4: #{siglip_loss.1} parent=1 // loop_header_branch
      %15 = sbr.rel (%p13) target = $region8
    $region5: #{siglip_loss.1} parent=1 // loop_body
      %s17 = ssub.s32 %s12, 1
      %s18 = ssub.s32 %s12, 2
      %s25 = sadd.s32 1, %s20
      %p26 = scmp.ge.s32.totalorder %s25, 2
      %s27 = scalar_select %p26, 0, %s25
      %s28 = sadd.s32 1, %s19
      %s29 = scalar_select %p26, %s28, %s19
      %p30 = scmp.ge.s32.totalorder %s29, 2
      %s31 = scalar_select %p30, 0, %s29
      %s33 = sadd.s32 %s32, 1
      %p36 = scmp.eq.s32.totalorder %s12, 3
      %p37 = scmp.ne.s32.totalorder %s32, %s34
      %p38 = scmp.eq.s32.totalorder %s12, 0
      %p39 = por %p37, %p38
      %p40 = scmp.ne.s32.totalorder %s32, %s34
      %p41 = scmp.eq.s32.totalorder %s17, 3
      %p42 = por %p40, %p41
      %p43 = scmp.ne.s32.totalorder %s34, %s35
      %p44 = scmp.eq.s32.totalorder %s17, 0
      %p45 = por %p43, %p44
      %p46 = scmp.ne.s32.totalorder %s34, %s35
      %p47 = scmp.eq.s32.totalorder %s18, 3
      %p48 = por %p46, %p47
      %p50 = scmp.ne.s32.totalorder %s35, %s49
      %p51 = scmp.eq.s32.totalorder %s18, 0
      %p52 = por %p50, %p51
      %s54 = sadd.s32 %s53, 1
      %p57 = scmp.eq.s32.totalorder %s12, 3
      %p58 = scmp.ne.s32.totalorder %s53, %s55
      %p59 = scmp.eq.s32.totalorder %s12, 0
      %p60 = por %p58, %p59
      %p61 = scmp.ne.s32.totalorder %s53, %s55
      %p62 = scmp.eq.s32.totalorder %s17, 3
      %p63 = por %p61, %p62
      %p64 = scmp.ne.s32.totalorder %s55, %s56
      %p65 = scmp.eq.s32.totalorder %s17, 0
      %p66 = por %p64, %p65
      %p67 = scmp.ne.s32.totalorder %s55, %s56
      %p68 = scmp.eq.s32.totalorder %s18, 3
      %p69 = por %p67, %p68
      %p71 = scmp.ne.s32.totalorder %s56, %s70
      %p72 = scmp.eq.s32.totalorder %s18, 0
      %p73 = por %p71, %p72
      %s74 = ssub.s32 %s19, %s31
      %p75 = scmp.eq.s32.totalorder %s74, 0
      %s77 = sadd.s32 %s76, 1
      %s78 = scalar_select %p75, %s76, %s77
      %p81 = pneg %p75
      %p82 = scmp.eq.s32.totalorder %s12, 3
      %p83 = por %p81, %p82
      %p84 = scmp.ne.s32.totalorder %s76, %s79
      %p85 = scmp.eq.s32.totalorder %s12, 0
      %p86 = por %p84, %p85
      %p87 = scmp.ne.s32.totalorder %s76, %s79
      %p88 = scmp.eq.s32.totalorder %s17, 3
      %p89 = por %p87, %p88
      %p90 = scmp.ne.s32.totalorder %s79, %s80
      %p91 = scmp.eq.s32.totalorder %s17, 0
      %p92 = por %p90, %p91
      %p93 = scmp.ne.s32.totalorder %s79, %s80
      %p94 = scmp.eq.s32.totalorder %s18, 3
      %p95 = por %p93, %p94
      %p97 = scmp.ne.s32.totalorder %s80, %s96
      %p98 = scmp.eq.s32.totalorder %s18, 0
      %p99 = por %p97, %p98
      %s100 = ssub.s32 %s20, %s27
      %p101 = scmp.eq.s32.totalorder %s100, 0
      %s103 = sadd.s32 %s102, 1
      %s104 = scalar_select %p101, %s102, %s103
      %p107 = pneg %p101
      %p108 = scmp.eq.s32.totalorder %s12, 3
      %p109 = por %p107, %p108
      %p110 = scmp.ne.s32.totalorder %s102, %s105
      %p111 = scmp.eq.s32.totalorder %s12, 0
      %p112 = por %p110, %p111
      %p113 = scmp.ne.s32.totalorder %s102, %s105
      %p114 = scmp.eq.s32.totalorder %s17, 3
      %p115 = por %p113, %p114
      %p116 = scmp.ne.s32.totalorder %s105, %s106
      %p117 = scmp.eq.s32.totalorder %s17, 0
      %p118 = por %p116, %p117
      %p119 = scmp.ne.s32.totalorder %s105, %s106
      %p120 = scmp.eq.s32.totalorder %s18, 3
      %p121 = por %p119, %p120
      %p123 = scmp.ne.s32.totalorder %s106, %s122
      %p124 = scmp.eq.s32.totalorder %s18, 0
      %p125 = por %p123, %p124
      %s126 = ssub.s32 %s19, %s31
      %p127 = scmp.eq.s32.totalorder %s126, 0
      %s129 = sadd.s32 %s128, 1
      %s130 = scalar_select %p127, %s128, %s129
      %p133 = pneg %p127
      %p134 = scmp.eq.s32.totalorder %s12, 3
      %p135 = por %p133, %p134
      %p136 = scmp.ne.s32.totalorder %s128, %s131
      %p137 = scmp.eq.s32.totalorder %s12, 0
      %p138 = por %p136, %p137
      %p139 = scmp.ne.s32.totalorder %s128, %s131
      %p140 = scmp.eq.s32.totalorder %s17, 3
      %p141 = por %p139, %p140
      %p142 = scmp.ne.s32.totalorder %s131, %s132
      %p143 = scmp.eq.s32.totalorder %s17, 0
      %p144 = por %p142, %p143
      %p145 = scmp.ne.s32.totalorder %s131, %s132
      %p146 = scmp.eq.s32.totalorder %s18, 3
      %p147 = por %p145, %p146
      %p149 = scmp.ne.s32.totalorder %s132, %s148
      %p150 = scmp.eq.s32.totalorder %s18, 0
      %p151 = por %p149, %p150
      %p152 = scmp.le.s32.totalorder 1, %s12
      %p153 = scmp.lt.s32.totalorder %s12, 5
      %p154 = pnand %p152, %p153
      %p155 = pneg %p154
      // Predicated region
      $region9: #{siglip_loss.1} parent=5 // pred_check
        _
      $region10: #{siglip_loss.1} parent=5 // pred_check_branch
        %157 = sbr.rel (%p154) target = $region12
      $region11: #{siglip_loss.1} parent=5 // pred_region
        %s158 = ssub.s32 %s12, 1
        // Predicated region
        $region13: #{siglip_loss.1} parent=11 // pred_check
          %p159 = pneg %p45
        $region14: #{siglip_loss.1} parent=11 // pred_check_branch
          %161 = sbr.rel (%p159) target = $region16
        $region15: #{siglip_loss.1} parent=11 // pred_region
          _
        $region16: #{siglip_loss.1} parent=11 // pred_fallthru
          _
        // Predicated region
        $region17: #{siglip_loss.1} parent=11 // pred_check
          %p162 = pneg %p66
        $region18: #{siglip_loss.1} parent=11 // pred_check_branch
          %164 = sbr.rel (%p162) target = $region20
        $region19: #{siglip_loss.1} parent=11 // pred_region
          _
        $region20: #{siglip_loss.1} parent=11 // pred_fallthru
          _
      $region12: #{siglip_loss.1} parent=5 // pred_fallthru
        _
      %p165 = scmp.lt.s32.totalorder %s12, 4
      // Predicated region
      $region21: #{siglip_loss.1} parent=5 // pred_check
        %p166 = pneg %p165
      $region22: #{siglip_loss.1} parent=5 // pred_check_branch
        %168 = sbr.rel (%p166) target = $region24
      $region23: #{siglip_loss.1} parent=5 // pred_region
        // Predicated region
        $region25: #{siglip_loss.1} parent=23 // pred_check
          %p169 = pneg %p86
        $region26: #{siglip_loss.1} parent=23 // pred_check_branch
          %171 = sbr.rel (%p169) target = $region28
        $region27: #{siglip_loss.1} parent=23 // pred_region
          %s172 = smul.u32 16, %s19
          %p173 = scmp.lt.s32.totalorder %s172, 31
          %s174 = scalar_select %p173, %s172, 31
          %s175 = smul.addr %s174, 8
          %s176 = scalar_lea.vmem %s2, %s175
          %s177 = smul.u32 16, %s19
        $region28: #{siglip_loss.1} parent=23 // pred_fallthru
          _
        // Predicated region
        $region29: #{siglip_loss.1} parent=23 // pred_check
          %p178 = pneg %p112
        $region30: #{siglip_loss.1} parent=23 // pred_check_branch
          %180 = sbr.rel (%p178) target = $region32
        $region31: #{siglip_loss.1} parent=23 // pred_region
          %s181 = sand.u32 %s102, 1
          %s182 = sand.u32 %s102, 1
          %s183 = smul.addr %s182, 128
          %s184 = scalar_lea.vmem [#allocation5], %s183
          %s185 = smul.addr %s20, 8
          %s186 = scalar_lea.vmem %s3, %s185
          // Predicated region
          $region33: #{siglip_loss.1} parent=31 // pred_check
            _
          $region34: #{siglip_loss.1} parent=31 // pred_check_branch
            %188 = sbr.rel (0) target = $region36
          $region35: #{siglip_loss.1} parent=31 // pred_region
            // Predicated region
            $region37: #{siglip_loss.1} parent=35 // pred_check
              _
            $region38: #{siglip_loss.1} parent=35 // pred_check_branch
              %190 = sbr.rel (0) target = $region40
            $region39: #{siglip_loss.1} parent=35 // pred_region
              // Predicated region
              $region52: #{siglip_loss.1} parent=39 // pred_check
                _
              $region53: #{siglip_loss.1} parent=39 // pred_check_branch
                %236 = sbr.rel (0) target = $region55
              $region54: #{siglip_loss.1} parent=39 // pred_region
                loop: start=0, step=1, limit=1
                $region56: #{siglip_loss.1} parent=54 // loop_pre_header
                  _
                $region57: #{siglip_loss.1} parent=54 // loop_header
                  %s238 = sphi 0, %s242
                  %p239 = scmp.ge.s32.totalorder %s238, 1
                  %s243 = sphi %s186, %s186
                  %s244 = sphi %s184, %s184
                $region58: #{siglip_loss.1} parent=54 // loop_header_branch
                  %241 = sbr.rel (%p239) target = $region62
                $region59: #{siglip_loss.1} parent=54 // loop_body
                  %v245 = vld [vmem:[%s243] sm:$0xff]
                  %246 = vst [vmem:[%s244] sm:$0xff] %v245
                  %v247 = vld [vmem:[%s243 + $0x10] sm:$0xff]
                  %248 = vst [vmem:[%s244 + $0x8] sm:$0xff] %v247
                  %v249 = vld [vmem:[%s243 + $0x20] sm:$0xff]
                  %250 = vst [vmem:[%s244 + $0x10] sm:$0xff] %v249
                  %v251 = vld [vmem:[%s243 + $0x30] sm:$0xff]
                  %252 = vst [vmem:[%s244 + $0x18] sm:$0xff] %v251
                  %v253 = vld [vmem:[%s243 + $0x40] sm:$0xff]
                  %254 = vst [vmem:[%s244 + $0x20] sm:$0xff] %v253
                  %v255 = vld [vmem:[%s243 + $0x50] sm:$0xff]
                  %256 = vst [vmem:[%s244 + $0x28] sm:$0xff] %v255
                  %v257 = vld [vmem:[%s243 + $0x60] sm:$0xff]
                  %258 = vst [vmem:[%s244 + $0x30] sm:$0xff] %v257
                  %v259 = vld [vmem:[%s243 + $0x70] sm:$0xff]
                  %260 = vst [vmem:[%s244 + $0x38] sm:$0xff] %v259
                  %v261 = vld [vmem:[%s243 + $0x80] sm:$0xff]
                  %262 = vst [vmem:[%s244 + $0x40] sm:$0xff] %v261
                  %v263 = vld [vmem:[%s243 + $0x90] sm:$0xff]
                  %264 = vst [vmem:[%s244 + $0x48] sm:$0xff] %v263
                  %v265 = vld [vmem:[%s243 + $0xa0] sm:$0xff]
                  %266 = vst [vmem:[%s244 + $0x50] sm:$0xff] %v265
                  %v267 = vld [vmem:[%s243 + $0xb0] sm:$0xff]
                  %268 = vst [vmem:[%s244 + $0x58] sm:$0xff] %v267
                  %v269 = vld [vmem:[%s243 + $0xc0] sm:$0xff]
                  %270 = vst [vmem:[%s244 + $0x60] sm:$0xff] %v269
                  %v271 = vld [vmem:[%s243 + $0xd0] sm:$0xff]
                  %272 = vst [vmem:[%s244 + $0x68] sm:$0xff] %v271
                  %v273 = vld [vmem:[%s243 + $0xe0] sm:$0xff]
                  %274 = vst [vmem:[%s244 + $0x70] sm:$0xff] %v273
                  %v275 = vld [vmem:[%s243 + $0xf0] sm:$0xff]
                  %276 = vst [vmem:[%s244 + $0x78] sm:$0xff] %v275
                $region60: #{siglip_loss.1} parent=54 // loop_footer
                  %s242 = sadd.s32 1, %s238
                $region61: #{siglip_loss.1} parent=54 // loop_footer_branch
                  %237 = sbr.rel target = $region57
                $region62: #{siglip_loss.1} parent=54 // loop_exit
                  _
              $region55: #{siglip_loss.1} parent=39 // pred_fallthru
                _
              // Predicated region
              $region63: #{siglip_loss.1} parent=39 // pred_check
                _
              $region64: #{siglip_loss.1} parent=39 // pred_check_branch
                %278 = sbr.rel target = $region66
              $region65: #{siglip_loss.1} parent=39 // pred_region
                _
              $region66: #{siglip_loss.1} parent=39 // pred_fallthru
                _
            $region40: #{siglip_loss.1} parent=35 // pred_fallthru
              _
            // Predicated region
            $region41: #{siglip_loss.1} parent=35 // pred_check
              _
            $region42: #{siglip_loss.1} parent=35 // pred_check_branch
              %192 = sbr.rel target = $region44
            $region43: #{siglip_loss.1} parent=35 // pred_region
              %s194 = ssub.s32 256, 1
              loop: start=0, step=1, limit=1
              $region45: #{siglip_loss.1} parent=43 // loop_pre_header
                _
              $region46: #{siglip_loss.1} parent=43 // loop_header
                %s196 = sphi 0, %s200
                %p197 = scmp.ge.s32.totalorder %s196, 1
                %s201 = sphi %s186, %s186
                %s202 = sphi %s184, %s184
              $region47: #{siglip_loss.1} parent=43 // loop_header_branch
                %199 = sbr.rel (%p197) target = $region51
              $region48: #{siglip_loss.1} parent=43 // loop_body
                %v203 = vld [vmem:[%s201] sm:%s194]
                %204 = vst [vmem:[%s202] sm:%s194] %v203
                %v205 = vld [vmem:[%s201 + $0x10] sm:%s194]
                %206 = vst [vmem:[%s202 + $0x8] sm:%s194] %v205
                %v207 = vld [vmem:[%s201 + $0x20] sm:%s194]
                %208 = vst [vmem:[%s202 + $0x10] sm:%s194] %v207
                %v209 = vld [vmem:[%s201 + $0x30] sm:%s194]
                %210 = vst [vmem:[%s202 + $0x18] sm:%s194] %v209
                %v211 = vld [vmem:[%s201 + $0x40] sm:%s194]
                %212 = vst [vmem:[%s202 + $0x20] sm:%s194] %v211
                %v213 = vld [vmem:[%s201 + $0x50] sm:%s194]
                %214 = vst [vmem:[%s202 + $0x28] sm:%s194] %v213
                %v215 = vld [vmem:[%s201 + $0x60] sm:%s194]
                %216 = vst [vmem:[%s202 + $0x30] sm:%s194] %v215
                %v217 = vld [vmem:[%s201 + $0x70] sm:%s194]
                %218 = vst [vmem:[%s202 + $0x38] sm:%s194] %v217
                %v219 = vld [vmem:[%s201 + $0x80] sm:%s194]
                %220 = vst [vmem:[%s202 + $0x40] sm:%s194] %v219
                %v221 = vld [vmem:[%s201 + $0x90] sm:%s194]
                %222 = vst [vmem:[%s202 + $0x48] sm:%s194] %v221
                %v223 = vld [vmem:[%s201 + $0xa0] sm:%s194]
                %224 = vst [vmem:[%s202 + $0x50] sm:%s194] %v223
                %v225 = vld [vmem:[%s201 + $0xb0] sm:%s194]
                %226 = vst [vmem:[%s202 + $0x58] sm:%s194] %v225
                %v227 = vld [vmem:[%s201 + $0xc0] sm:%s194]
                %228 = vst [vmem:[%s202 + $0x60] sm:%s194] %v227
                %v229 = vld [vmem:[%s201 + $0xd0] sm:%s194]
                %230 = vst [vmem:[%s202 + $0x68] sm:%s194] %v229
                %v231 = vld [vmem:[%s201 + $0xe0] sm:%s194]
                %232 = vst [vmem:[%s202 + $0x70] sm:%s194] %v231
                %v233 = vld [vmem:[%s201 + $0xf0] sm:%s194]
                %234 = vst [vmem:[%s202 + $0x78] sm:%s194] %v233
              $region49: #{siglip_loss.1} parent=43 // loop_footer
                %s200 = sadd.s32 1, %s196
              $region50: #{siglip_loss.1} parent=43 // loop_footer_branch
                %195 = sbr.rel target = $region46
              $region51: #{siglip_loss.1} parent=43 // loop_exit
                _
            $region44: #{siglip_loss.1} parent=35 // pred_fallthru
              _
          $region36: #{siglip_loss.1} parent=31 // pred_fallthru
            _
          %279 = vnop
        $region32: #{siglip_loss.1} parent=23 // pred_fallthru
          _
      $region24: #{siglip_loss.1} parent=5 // pred_fallthru
        _
      %p280 = scmp.le.s32.totalorder 1, %s12
      %p281 = scmp.lt.s32.totalorder %s12, 5
      %p282 = pnand %p280, %p281
      %p283 = pneg %p282
      // Predicated region
      $region67: #{siglip_loss.1} parent=5 // pred_check
        _
      $region68: #{siglip_loss.1} parent=5 // pred_check_branch
        %285 = sbr.rel (%p282) target = $region70
      $region69: #{siglip_loss.1} parent=5 // pred_region
        %s286 = ssub.s32 %s12, 1
        %s287 = sand.u32 %s105, 1
        %s288 = sand.u32 %s105, 1
        %s289 = smul.addr %s288, 128
        %s290 = scalar_lea.vmem [#allocation5], %s289
        // Predicated region
        $region71: #{siglip_loss.1} parent=69 // pred_check
          %p291 = pneg %p118
        $region72: #{siglip_loss.1} parent=69 // pred_check_branch
          %293 = sbr.rel (%p291) target = $region74
        $region73: #{siglip_loss.1} parent=69 // pred_region
          _
        $region74: #{siglip_loss.1} parent=69 // pred_fallthru
          _
        %p294 = pneg %p45
        %p295 = pneg %p42
        %p296 = pneg %p66
        %p297 = pneg %p63
        %s298 = smul.u32 16, %s21
        %p299 = scmp.lt.s32.totalorder %s298, 31
        %s300 = scalar_select %p299, %s298, 31
        %s301 = smul.addr %s300, 8
        %s302 = scalar_lea.vmem %s2, %s301
        %p303 = pneg %p92
        %p304 = pneg %p89
        %s305 = sand.u32 %s105, 1
        %s306 = sand.u32 %s105, 1
        %s307 = smul.addr %s306, 128
        %s308 = scalar_lea.vmem [#allocation5], %s307
        %p309 = pneg %p118
        %p310 = pneg %p115
        %p311 = pneg %p144
        %p312 = pneg %p141
        %p313 = scmp.lt.s32.totalorder %s21, 1
        %s314 = scalar_select %p313, %s21, 1
        %s315 = smul.addr %s314, 8
        %s316 = scalar_lea.vmem %s4, %s315
        %s317 = smul.u32 16, %s21
        %p318 = scmp.lt.s32.totalorder %s317, 31
        %s319 = scalar_select %p318, %s317, 31
        %s320 = smul.addr %s319, 8
        %s321 = scalar_lea.vmem %s2, %s320
        %s322 = smul.u32 16, %s21
        %p323 = scmp.lt.s32.totalorder %s21, 1
        %s324 = scalar_select %p323, %s21, 1
        %s325 = smul.addr %s324, 8
        %s326 = scalar_lea.vmem %s4, %s325
        %p327 = scmp.eq.s32.totalorder %s22, 0
        // Predicated region
        $region75: #{siglip_loss.1} parent=69 // pred_check
          %p328 = pneg %p327
        $region76: #{siglip_loss.1} parent=69 // pred_check_branch
          %330 = sbr.rel (%p328) target = $region78
        $region77: #{siglip_loss.1} parent=69 // pred_region
          %331 = vst [vmem:[#allocation2] sm:$0xff] 0.0
        $region78: #{siglip_loss.1} parent=69 // pred_fallthru
          _
        %v332 = vld [vmem:[%s321] sm:$0xff]
        %v333 = vld [vmem:[%s321 + $0x8] sm:$0xff]
        %v334 = vld [vmem:[%s321 + $0x10] sm:$0xff]
        %v335 = vld [vmem:[%s321 + $0x18] sm:$0xff]
        %v336 = vld [vmem:[%s321 + $0x20] sm:$0xff]
        %v337 = vld [vmem:[%s321 + $0x28] sm:$0xff]
        %v338 = vld [vmem:[%s321 + $0x30] sm:$0xff]
        %v339 = vld [vmem:[%s321 + $0x38] sm:$0xff]
        %v340 = vld [vmem:[%s321 + $0x40] sm:$0xff]
        %v341 = vld [vmem:[%s321 + $0x48] sm:$0xff]
        %v342 = vld [vmem:[%s321 + $0x50] sm:$0xff]
        %v343 = vld [vmem:[%s321 + $0x58] sm:$0xff]
        %v344 = vld [vmem:[%s321 + $0x60] sm:$0xff]
        %v345 = vld [vmem:[%s321 + $0x68] sm:$0xff]
        %v346 = vld [vmem:[%s321 + $0x70] sm:$0xff]
        %v347 = vld [vmem:[%s321 + $0x78] sm:$0xff]
        %v348 = vld [vmem:[%s290] sm:$0xff]
        %v349 = vld [vmem:[%s290 + $0x8] sm:$0xff]
        %v350 = vld [vmem:[%s290 + $0x10] sm:$0xff]
        %v351 = vld [vmem:[%s290 + $0x18] sm:$0xff]
        %v352 = vld [vmem:[%s290 + $0x20] sm:$0xff]
        %v353 = vld [vmem:[%s290 + $0x28] sm:$0xff]
        %v354 = vld [vmem:[%s290 + $0x30] sm:$0xff]
        %v355 = vld [vmem:[%s290 + $0x38] sm:$0xff]
        %v356 = vld [vmem:[%s290 + $0x40] sm:$0xff]
        %v357 = vld [vmem:[%s290 + $0x48] sm:$0xff]
        %v358 = vld [vmem:[%s290 + $0x50] sm:$0xff]
        %v359 = vld [vmem:[%s290 + $0x58] sm:$0xff]
        %v360 = vld [vmem:[%s290 + $0x60] sm:$0xff]
        %v361 = vld [vmem:[%s290 + $0x68] sm:$0xff]
        %v362 = vld [vmem:[%s290 + $0x70] sm:$0xff]
        %v363 = vld [vmem:[%s290 + $0x78] sm:$0xff]
        %364 = vmatpush.msra.mxu0 %v363
        %365 = vmatpush.msra.mxu0 %v362
        %366 = vmatpush.msra.mxu0 %v361
        %367 = vmatpush.msra.mxu0 %v360
        %368 = vmatpush.msra.mxu0 %v359
        %369 = vmatpush.msra.mxu0 %v358
        %370 = vmatpush.msra.mxu0 %v357
        %371 = vmatpush.msra.mxu0 %v356
        %372 = vmatpush.msra.mxu0 %v355
        %373 = vmatpush.msra.mxu0 %v354
        %374 = vmatpush.msra.mxu0 %v353
        %375 = vmatpush.msra.mxu0 %v352
        %376 = vmatpush.msra.mxu0 %v351
        %377 = vmatpush.msra.mxu0 %v350
        %378 = vmatpush.msra.mxu0 %v349
        %379 = vmatpush.msra.mxu0 %v348
        %380 = vmatmul.f32.gmra.mxu0 %v332
        %v381 = vpop.f32.mrf.mxu0
        %v382 = vadd.f32 0.0, %v381
        %383 = vmatmul.f32.gmra.mxu0 %v333
        %v384 = vpop.f32.mrf.mxu0
        %v385 = vadd.f32 0.0, %v384
        %386 = vmatmul.f32.gmra.mxu0 %v334
        %v387 = vpop.f32.mrf.mxu0
        %v388 = vadd.f32 0.0, %v387
        %389 = vmatmul.f32.gmra.mxu0 %v335
        %v390 = vpop.f32.mrf.mxu0
        %v391 = vadd.f32 0.0, %v390
        %392 = vmatmul.f32.gmra.mxu0 %v336
        %v393 = vpop.f32.mrf.mxu0
        %v394 = vadd.f32 0.0, %v393
        %395 = vmatmul.f32.gmra.mxu0 %v337
        %v396 = vpop.f32.mrf.mxu0
        %v397 = vadd.f32 0.0, %v396
        %398 = vmatmul.f32.gmra.mxu0 %v338
        %v399 = vpop.f32.mrf.mxu0
        %v400 = vadd.f32 0.0, %v399
        %401 = vmatmul.f32.gmra.mxu0 %v339
        %v402 = vpop.f32.mrf.mxu0
        %v403 = vadd.f32 0.0, %v402
        %404 = vmatmul.f32.gmra.mxu0 %v340
        %v405 = vpop.f32.mrf.mxu0
        %v406 = vadd.f32 0.0, %v405
        %407 = vmatmul.f32.gmra.mxu0 %v341
        %v408 = vpop.f32.mrf.mxu0
        %v409 = vadd.f32 0.0, %v408
        %410 = vmatmul.f32.gmra.mxu0 %v342
        %v411 = vpop.f32.mrf.mxu0
        %v412 = vadd.f32 0.0, %v411
        %413 = vmatmul.f32.gmra.mxu0 %v343
        %v414 = vpop.f32.mrf.mxu0
        %v415 = vadd.f32 0.0, %v414
        %416 = vmatmul.f32.gmra.mxu0 %v344
        %v417 = vpop.f32.mrf.mxu0
        %v418 = vadd.f32 0.0, %v417
        %419 = vmatmul.f32.gmra.mxu0 %v345
        %v420 = vpop.f32.mrf.mxu0
        %v421 = vadd.f32 0.0, %v420
        %422 = vmatmul.f32.gmra.mxu0 %v346
        %v423 = vpop.f32.mrf.mxu0
        %v424 = vadd.f32 0.0, %v423
        %425 = vmatmul.f32.gmra.mxu0 %v347
        %v426 = vpop.f32.mrf.mxu0
        %v427 = vadd.f32 0.0, %v426
        %428 = vdwg.mxu0
        %s429 = sld [smem:[#allocation3]]
        %v430 = vstv %s429
        %v431 = vmul.f32 %v430, %v382
        %v432 = vmul.f32 %v430, %v385
        %v433 = vmul.f32 %v430, %v388
        %v434 = vmul.f32 %v430, %v391
        %v435 = vmul.f32 %v430, %v394
        %v436 = vmul.f32 %v430, %v397
        %v437 = vmul.f32 %v430, %v400
        %v438 = vmul.f32 %v430, %v403
        %v439 = vmul.f32 %v430, %v406
        %v440 = vmul.f32 %v430, %v409
        %v441 = vmul.f32 %v430, %v412
        %v442 = vmul.f32 %v430, %v415
        %v443 = vmul.f32 %v430, %v418
        %v444 = vmul.f32 %v430, %v421
        %v445 = vmul.f32 %v430, %v424
        %v446 = vmul.f32 %v430, %v427
        %s447 = sld [smem:[#allocation4]]
        %v448 = vstv %s447
        %v449 = vadd.f32 %v431, %v448
        %v450 = vadd.f32 %v432, %v448
        %v451 = vadd.f32 %v433, %v448
        %v452 = vadd.f32 %v434, %v448
        %v453 = vadd.f32 %v435, %v448
        %v454 = vadd.f32 %v436, %v448
        %v455 = vadd.f32 %v437, %v448
        %v456 = vadd.f32 %v438, %v448
        %v457 = vadd.f32 %v439, %v448
        %v458 = vadd.f32 %v440, %v448
        %v459 = vadd.f32 %v441, %v448
        %v460 = vadd.f32 %v442, %v448
        %v461 = vadd.f32 %v443, %v448
        %v462 = vadd.f32 %v444, %v448
        %v463 = vadd.f32 %v445, %v448
        %v464 = vadd.f32 %v446, %v448
        %v465 = vmax.f32 %v449, 0.0
        %v466 = vmax.f32 %v450, 0.0
        %v467 = vmax.f32 %v451, 0.0
        %v468 = vmax.f32 %v452, 0.0
        %v469 = vmax.f32 %v453, 0.0
        %v470 = vmax.f32 %v454, 0.0
        %v471 = vmax.f32 %v455, 0.0
        %v472 = vmax.f32 %v456, 0.0
        %v473 = vmax.f32 %v457, 0.0
        %v474 = vmax.f32 %v458, 0.0
        %v475 = vmax.f32 %v459, 0.0
        %v476 = vmax.f32 %v460, 0.0
        %v477 = vmax.f32 %v461, 0.0
        %v478 = vmax.f32 %v462, 0.0
        %v479 = vmax.f32 %v463, 0.0
        %v480 = vmax.f32 %v464, 0.0
        %v481 = vand.u32 2147483647, %v449
        %v482 = vand.u32 2147483647, %v450
        %v483 = vand.u32 2147483647, %v451
        %v484 = vand.u32 2147483647, %v452
        %v485 = vand.u32 2147483647, %v453
        %v486 = vand.u32 2147483647, %v454
        %v487 = vand.u32 2147483647, %v455
        %v488 = vand.u32 2147483647, %v456
        %v489 = vand.u32 2147483647, %v457
        %v490 = vand.u32 2147483647, %v458
        %v491 = vand.u32 2147483647, %v459
        %v492 = vand.u32 2147483647, %v460
        %v493 = vand.u32 2147483647, %v461
        %v494 = vand.u32 2147483647, %v462
        %v495 = vand.u32 2147483647, %v463
        %v496 = vand.u32 2147483647, %v464
        %v497 = vsub.f32 0.0, %v481
        %v498 = vsub.f32 0.0, %v482
        %v499 = vsub.f32 0.0, %v483
        %v500 = vsub.f32 0.0, %v484
        %v501 = vsub.f32 0.0, %v485
        %v502 = vsub.f32 0.0, %v486
        %v503 = vsub.f32 0.0, %v487
        %v504 = vsub.f32 0.0, %v488
        %v505 = vsub.f32 0.0, %v489
        %v506 = vsub.f32 0.0, %v490
        %v507 = vsub.f32 0.0, %v491
        %v508 = vsub.f32 0.0, %v492
        %v509 = vsub.f32 0.0, %v493
        %v510 = vsub.f32 0.0, %v494
        %v511 = vsub.f32 0.0, %v495
        %v512 = vsub.f32 0.0, %v496
        %v513 = vmul.f32 %v497, 1.442695
        %v514 = vpow.pop %v513
        %v515 = vmul.f32 %v498, 1.442695
        %v516 = vpow.pop %v515
        %v517 = vmul.f32 %v499, 1.442695
        %v518 = vpow.pop %v517
        %v519 = vmul.f32 %v500, 1.442695
        %v520 = vpow.pop %v519
        %v521 = vmul.f32 %v501, 1.442695
        %v522 = vpow.pop %v521
        %v523 = vmul.f32 %v502, 1.442695
        %v524 = vpow.pop %v523
        %v525 = vmul.f32 %v503, 1.442695
        %v526 = vpow.pop %v525
        %v527 = vmul.f32 %v504, 1.442695
        %v528 = vpow.pop %v527
        %v529 = vmul.f32 %v505, 1.442695
        %v530 = vpow.pop %v529
        %v531 = vmul.f32 %v506, 1.442695
        %v532 = vpow.pop %v531
        %v533 = vmul.f32 %v507, 1.442695
        %v534 = vpow.pop %v533
        %v535 = vmul.f32 %v508, 1.442695
        %v536 = vpow.pop %v535
        %v537 = vmul.f32 %v509, 1.442695
        %v538 = vpow.pop %v537
        %v539 = vmul.f32 %v510, 1.442695
        %v540 = vpow.pop %v539
        %v541 = vmul.f32 %v511, 1.442695
        %v542 = vpow.pop %v541
        %v543 = vmul.f32 %v512, 1.442695
        %v544 = vpow.pop %v543
        %v545 = vadd.f32 %v514, 1.0
        %v546 = vlog2.pop %v545
        %v547 = vmul.f32 %v546, 0.6931472
        %v548 = vmul.f32 -0.5, %v514
        %v549 = vadd.f32 %v548, 1.0
        %v550 = vmul.f32 %v549, %v514
        %v551 = vand.u32 2147483647, %v514
        %vm552 = vcmp.lt.f32.partialorder %v551, 0.0004427343
        %v553 = vsel %vm552, %v550, %v547
        %v554 = vadd.f32 %v516, 1.0
        %v555 = vlog2.pop %v554
        %v556 = vmul.f32 %v555, 0.6931472
        %v557 = vmul.f32 -0.5, %v516
        %v558 = vadd.f32 %v557, 1.0
        %v559 = vmul.f32 %v558, %v516
        %v560 = vand.u32 2147483647, %v516
        %vm561 = vcmp.lt.f32.partialorder %v560, 0.0004427343
        %v562 = vsel %vm561, %v559, %v556
        %v563 = vadd.f32 %v518, 1.0
        %v564 = vlog2.pop %v563
        %v565 = vmul.f32 %v564, 0.6931472
        %v566 = vmul.f32 -0.5, %v518
        %v567 = vadd.f32 %v566, 1.0
        %v568 = vmul.f32 %v567, %v518
        %v569 = vand.u32 2147483647, %v518
        %vm570 = vcmp.lt.f32.partialorder %v569, 0.0004427343
        %v571 = vsel %vm570, %v568, %v565
        %v572 = vadd.f32 %v520, 1.0
        %v573 = vlog2.pop %v572
        %v574 = vmul.f32 %v573, 0.6931472
        %v575 = vmul.f32 -0.5, %v520
        %v576 = vadd.f32 %v575, 1.0
        %v577 = vmul.f32 %v576, %v520
        %v578 = vand.u32 2147483647, %v520
        %vm579 = vcmp.lt.f32.partialorder %v578, 0.0004427343
        %v580 = vsel %vm579, %v577, %v574
        %v581 = vadd.f32 %v522, 1.0
        %v582 = vlog2.pop %v581
        %v583 = vmul.f32 %v582, 0.6931472
        %v584 = vmul.f32 -0.5, %v522
        %v585 = vadd.f32 %v584, 1.0
        %v586 = vmul.f32 %v585, %v522
        %v587 = vand.u32 2147483647, %v522
        %vm588 = vcmp.lt.f32.partialorder %v587, 0.0004427343
        %v589 = vsel %vm588, %v586, %v583
        %v590 = vadd.f32 %v524, 1.0
        %v591 = vlog2.pop %v590
        %v592 = vmul.f32 %v591, 0.6931472
        %v593 = vmul.f32 -0.5, %v524
        %v594 = vadd.f32 %v593, 1.0
        %v595 = vmul.f32 %v594, %v524
        %v596 = vand.u32 2147483647, %v524
        %vm597 = vcmp.lt.f32.partialorder %v596, 0.0004427343
        %v598 = vsel %vm597, %v595, %v592
        %v599 = vadd.f32 %v526, 1.0
        %v600 = vlog2.pop %v599
        %v601 = vmul.f32 %v600, 0.6931472
        %v602 = vmul.f32 -0.5, %v526
        %v603 = vadd.f32 %v602, 1.0
        %v604 = vmul.f32 %v603, %v526
        %v605 = vand.u32 2147483647, %v526
        %vm606 = vcmp.lt.f32.partialorder %v605, 0.0004427343
        %v607 = vsel %vm606, %v604, %v601
        %v608 = vadd.f32 %v528, 1.0
        %v609 = vlog2.pop %v608
        %v610 = vmul.f32 %v609, 0.6931472
        %v611 = vmul.f32 -0.5, %v528
        %v612 = vadd.f32 %v611, 1.0
        %v613 = vmul.f32 %v612, %v528
        %v614 = vand.u32 2147483647, %v528
        %vm615 = vcmp.lt.f32.partialorder %v614, 0.0004427343
        %v616 = vsel %vm615, %v613, %v610
        %v617 = vadd.f32 %v530, 1.0
        %v618 = vlog2.pop %v617
        %v619 = vmul.f32 %v618, 0.6931472
        %v620 = vmul.f32 -0.5, %v530
        %v621 = vadd.f32 %v620, 1.0
        %v622 = vmul.f32 %v621, %v530
        %v623 = vand.u32 2147483647, %v530
        %vm624 = vcmp.lt.f32.partialorder %v623, 0.0004427343
        %v625 = vsel %vm624, %v622, %v619
        %v626 = vadd.f32 %v532, 1.0
        %v627 = vlog2.pop %v626
        %v628 = vmul.f32 %v627, 0.6931472
        %v629 = vmul.f32 -0.5, %v532
        %v630 = vadd.f32 %v629, 1.0
        %v631 = vmul.f32 %v630, %v532
        %v632 = vand.u32 2147483647, %v532
        %vm633 = vcmp.lt.f32.partialorder %v632, 0.0004427343
        %v634 = vsel %vm633, %v631, %v628
        %v635 = vadd.f32 %v534, 1.0
        %v636 = vlog2.pop %v635
        %v637 = vmul.f32 %v636, 0.6931472
        %v638 = vmul.f32 -0.5, %v534
        %v639 = vadd.f32 %v638, 1.0
        %v640 = vmul.f32 %v639, %v534
        %v641 = vand.u32 2147483647, %v534
        %vm642 = vcmp.lt.f32.partialorder %v641, 0.0004427343
        %v643 = vsel %vm642, %v640, %v637
        %v644 = vadd.f32 %v536, 1.0
        %v645 = vlog2.pop %v644
        %v646 = vmul.f32 %v645, 0.6931472
        %v647 = vmul.f32 -0.5, %v536
        %v648 = vadd.f32 %v647, 1.0
        %v649 = vmul.f32 %v648, %v536
        %v650 = vand.u32 2147483647, %v536
        %vm651 = vcmp.lt.f32.partialorder %v650, 0.0004427343
        %v652 = vsel %vm651, %v649, %v646
        %v653 = vadd.f32 %v538, 1.0
        %v654 = vlog2.pop %v653
        %v655 = vmul.f32 %v654, 0.6931472
        %v656 = vmul.f32 -0.5, %v538
        %v657 = vadd.f32 %v656, 1.0
        %v658 = vmul.f32 %v657, %v538
        %v659 = vand.u32 2147483647, %v538
        %vm660 = vcmp.lt.f32.partialorder %v659, 0.0004427343
        %v661 = vsel %vm660, %v658, %v655
        %v662 = vadd.f32 %v540, 1.0
        %v663 = vlog2.pop %v662
        %v664 = vmul.f32 %v663, 0.6931472
        %v665 = vmul.f32 -0.5, %v540
        %v666 = vadd.f32 %v665, 1.0
        %v667 = vmul.f32 %v666, %v540
        %v668 = vand.u32 2147483647, %v540
        %vm669 = vcmp.lt.f32.partialorder %v668, 0.0004427343
        %v670 = vsel %vm669, %v667, %v664
        %v671 = vadd.f32 %v542, 1.0
        %v672 = vlog2.pop %v671
        %v673 = vmul.f32 %v672, 0.6931472
        %v674 = vmul.f32 -0.5, %v542
        %v675 = vadd.f32 %v674, 1.0
        %v676 = vmul.f32 %v675, %v542
        %v677 = vand.u32 2147483647, %v542
        %vm678 = vcmp.lt.f32.partialorder %v677, 0.0004427343
        %v679 = vsel %vm678, %v676, %v673
        %v680 = vadd.f32 %v544, 1.0
        %v681 = vlog2.pop %v680
        %v682 = vmul.f32 %v681, 0.6931472
        %v683 = vmul.f32 -0.5, %v544
        %v684 = vadd.f32 %v683, 1.0
        %v685 = vmul.f32 %v684, %v544
        %v686 = vand.u32 2147483647, %v544
        %vm687 = vcmp.lt.f32.partialorder %v686, 0.0004427343
        %v688 = vsel %vm687, %v685, %v682
        %v689 = vadd.f32 %v465, %v553
        %v690 = vadd.f32 %v466, %v562
        %v691 = vadd.f32 %v467, %v571
        %v692 = vadd.f32 %v468, %v580
        %v693 = vadd.f32 %v469, %v589
        %v694 = vadd.f32 %v470, %v598
        %v695 = vadd.f32 %v471, %v607
        %v696 = vadd.f32 %v472, %v616
        %v697 = vadd.f32 %v473, %v625
        %v698 = vadd.f32 %v474, %v634
        %v699 = vadd.f32 %v475, %v643
        %v700 = vadd.f32 %v476, %v652
        %v701 = vadd.f32 %v477, %v661
        %v702 = vadd.f32 %v478, %v670
        %v703 = vadd.f32 %v479, %v679
        %v704 = vadd.f32 %v480, %v688
        %v705 = vld [vmem:[#allocation2] sm:$0xff]
        %v706 = vadd.f32 %v689, %v690
        %v707 = vadd.f32 %v691, %v692
        %v708 = vadd.f32 %v693, %v694
        %v709 = vadd.f32 %v695, %v696
        %v710 = vadd.f32 %v697, %v698
        %v711 = vadd.f32 %v699, %v700
        %v712 = vadd.f32 %v701, %v702
        %v713 = vadd.f32 %v703, %v704
        %v714 = vadd.f32 %v706, %v707
        %v715 = vadd.f32 %v708, %v709
        %v716 = vadd.f32 %v710, %v711
        %v717 = vadd.f32 %v712, %v713
        %v718 = vadd.f32 %v714, %v715
        %v719 = vadd.f32 %v716, %v717
        %v720 = vadd.f32 %v718, %v719
        %v721 = vadd.f32 %v705, %v720
        %722 = vst [vmem:[#allocation2] sm:$0xff] %v721
        %p723 = scmp.eq.s32.totalorder %s21, %s22
        // Predicated region
        $region79: #{siglip_loss.1} parent=69 // pred_check
          %p724 = pneg %p723
        $region80: #{siglip_loss.1} parent=69 // pred_check_branch
          %726 = sbr.rel (%p724) target = $region82
        $region81: #{siglip_loss.1} parent=69 // pred_region
          %v727 = vlaneseq
          %v728 = vshrl.u32 %v727, 7
          %v729 = vadd.s32 %v728, 8
          %v730 = vadd.s32 %v728, 16
          %v731 = vadd.s32 %v728, 24
          %v732 = vadd.s32 %v728, 32
          %v733 = vadd.s32 %v728, 40
          %v734 = vadd.s32 %v728, 48
          %v735 = vadd.s32 %v728, 56
          %v736 = vadd.s32 %v728, 64
          %v737 = vadd.s32 %v728, 72
          %v738 = vadd.s32 %v728, 80
          %v739 = vadd.s32 %v728, 88
          %v740 = vadd.s32 %v728, 96
          %v741 = vadd.s32 %v728, 104
          %v742 = vadd.s32 %v728, 112
          %v743 = vadd.s32 %v728, 120
          %v744 = vlaneseq
          %v745 = vand.u32 %v744, 127
          %vm746 = vcmp.eq.s32.totalorder %v728, %v745
          %vm747 = vcmp.eq.s32.totalorder %v729, %v745
          %vm748 = vcmp.eq.s32.totalorder %v730, %v745
          %vm749 = vcmp.eq.s32.totalorder %v731, %v745
          %vm750 = vcmp.eq.s32.totalorder %v732, %v745
          %vm751 = vcmp.eq.s32.totalorder %v733, %v745
          %vm752 = vcmp.eq.s32.totalorder %v734, %v745
          %vm753 = vcmp.eq.s32.totalorder %v735, %v745
          %vm754 = vcmp.eq.s32.totalorder %v736, %v745
          %vm755 = vcmp.eq.s32.totalorder %v737, %v745
          %vm756 = vcmp.eq.s32.totalorder %v738, %v745
          %vm757 = vcmp.eq.s32.totalorder %v739, %v745
          %vm758 = vcmp.eq.s32.totalorder %v740, %v745
          %vm759 = vcmp.eq.s32.totalorder %v741, %v745
          %vm760 = vcmp.eq.s32.totalorder %v742, %v745
          %vm761 = vcmp.eq.s32.totalorder %v743, %v745
          %v762 = vsel %vm746, %v449, 0.0
          %v763 = vsel %vm747, %v450, 0.0
          %v764 = vsel %vm748, %v451, 0.0
          %v765 = vsel %vm749, %v452, 0.0
          %v766 = vsel %vm750, %v453, 0.0
          %v767 = vsel %vm751, %v454, 0.0
          %v768 = vsel %vm752, %v455, 0.0
          %v769 = vsel %vm753, %v456, 0.0
          %v770 = vsel %vm754, %v457, 0.0
          %v771 = vsel %vm755, %v458, 0.0
          %v772 = vsel %vm756, %v459, 0.0
          %v773 = vsel %vm757, %v460, 0.0
          %v774 = vsel %vm758, %v461, 0.0
          %v775 = vsel %vm759, %v462, 0.0
          %v776 = vsel %vm760, %v463, 0.0
          %v777 = vsel %vm761, %v464, 0.0
          %v778 = vld [vmem:[#allocation2] sm:$0xff]
          %v779 = vadd.f32 %v762, %v763
          %v780 = vadd.f32 %v764, %v765
          %v781 = vadd.f32 %v766, %v767
          %v782 = vadd.f32 %v768, %v769
          %v783 = vadd.f32 %v770, %v771
          %v784 = vadd.f32 %v772, %v773
          %v785 = vadd.f32 %v774, %v775
          %v786 = vadd.f32 %v776, %v777
          %v787 = vadd.f32 %v779, %v780
          %v788 = vadd.f32 %v781, %v782
          %v789 = vadd.f32 %v783, %v784
          %v790 = vadd.f32 %v785, %v786
          %v791 = vadd.f32 %v787, %v788
          %v792 = vadd.f32 %v789, %v790
          %v793 = vadd.f32 %v791, %v792
          %v794 = vsub.f32 %v778, %v793
          %795 = vst [vmem:[#allocation2] sm:$0xff] %v794
        $region82: #{siglip_loss.1} parent=69 // pred_fallthru
          _
        %p796 = scmp.eq.s32.totalorder %s22, 1
        // Predicated region
        $region83: #{siglip_loss.1} parent=69 // pred_check
          %p797 = pneg %p796
        $region84: #{siglip_loss.1} parent=69 // pred_check_branch
          %799 = sbr.rel (%p797) target = $region86
        $region85: #{siglip_loss.1} parent=69 // pred_region
          %v800 = vld [vmem:[#allocation2] sm:$0xff]
          %801 = vst [vmem:[%s326] sm:$0xff] %v800
        $region86: #{siglip_loss.1} parent=69 // pred_fallthru
          _
        %p802 = scmp.lt.s32.totalorder %s21, 1
        %s803 = scalar_select %p802, %s21, 1
        %s804 = smul.addr %s803, 8
        %s805 = scalar_lea.vmem %s4, %s804
        // Predicated region
        $region87: #{siglip_loss.1} parent=69 // pred_check
          %p806 = pneg %p141
        $region88: #{siglip_loss.1} parent=69 // pred_check_branch
          %808 = sbr.rel (%p806) target = $region90
        $region89: #{siglip_loss.1} parent=69 // pred_region
          _
        $region90: #{siglip_loss.1} parent=69 // pred_fallthru
          _
      $region70: #{siglip_loss.1} parent=5 // pred_fallthru
        _
      %p809 = scmp.le.s32.totalorder 2, %s12
      // Predicated region
      $region91: #{siglip_loss.1} parent=5 // pred_check
        %p810 = pneg %p809
      $region92: #{siglip_loss.1} parent=5 // pred_check_branch
        %812 = sbr.rel (%p810) target = $region94
      $region93: #{siglip_loss.1} parent=5 // pred_region
        %s813 = ssub.s32 %s12, 2
        // Predicated region
        $region95: #{siglip_loss.1} parent=93 // pred_check
          %p814 = pneg %p147
        $region96: #{siglip_loss.1} parent=93 // pred_check_branch
          %816 = sbr.rel (%p814) target = $region98
        $region97: #{siglip_loss.1} parent=93 // pred_region
          %p817 = scmp.lt.s32.totalorder %s23, 1
          %s818 = scalar_select %p817, %s23, 1
          %s819 = smul.addr %s818, 8
          %s820 = scalar_lea.vmem %s4, %s819
        $region98: #{siglip_loss.1} parent=93 // pred_fallthru
          _
      $region94: #{siglip_loss.1} parent=5 // pred_fallthru
        _
    $region6: #{siglip_loss.1} parent=1 // loop_footer
      %s16 = sadd.s32 1, %s12
    $region7: #{siglip_loss.1} parent=1 // loop_footer_branch
      %11 = sbr.rel target = $region3
    $region8: #{siglip_loss.1} parent=1 // loop_exit
      _

</llo_original>
